<compile_context>
chip_gen: v5e
topology: v5e:2x2
jax: 0.10.0
libtpu: 0.0.40
codegen_flags: <defaults>
</compile_context>

<pallas_src>
import functools

import numpy as np
import jax
import jax.numpy as jnp
from jax.experimental import pallas as pl
from jax.experimental.pallas import tpu as pltpu


def _round_up(x, m):
    return ((x + m - 1) // m) * m


def _celu(v):
    # CELU with alpha=1: v if v > 0 else exp(v) - 1  (computed in f32).
    return jnp.where(v > 0, v, jnp.exp(jnp.minimum(v, 0.0)) - 1.0)


# ---------------------------------------------------------------------------
# Chomp1d (the literal module):  y = x[:, :, :-chomp_size]
# ---------------------------------------------------------------------------
def _chomp1d_kernel(x_ref, o_ref):
    # Tiled path: in/out blocks have identical width -> full lane-dense copy.
    # Small-L fallback: copy only the kept prefix of the single block.
    o_ref[...] = x_ref[:, :, 0:o_ref.shape[-1]]


def chomp1d_pallas(x, chomp_size, *, l_tile=512):
    """x: (B, C, L) -> (B, C, L - chomp_size), NCL layout preserved."""
    B, C, L = x.shape
    chomp = int(chomp_size)
    assert 0 < chomp < L, "chomp_size must be in (0, L)"
    Lout = L - chomp

    if Lout >= 128:
        # Lane-dense L tiling: bounded per-step VMEM, unmasked stores, and the
        # chomped tail is never DMA'd from HBM.  Prefer a tile that divides
        # Lout; pl.cdiv covers the ragged case.
        TL = (min(l_tile, Lout) // 128) * 128
        for t in (1024, 512, 256, 128):
            if t <= TL and Lout % t == 0:
                TL = t
                break
        grid = (B, pl.cdiv(Lout, TL))
        in_spec = pl.BlockSpec((1, C, TL), lambda b, l: (b, 0, l))
        out_spec = pl.BlockSpec((1, C, TL), lambda b, l: (b, 0, l))
    else:
        # Tiny sequences: one block per batch row, slice inside the kernel.
        grid = (B,)
        in_spec = pl.BlockSpec((1, C, L), lambda b: (b, 0, 0))
        out_spec = pl.BlockSpec((1, C, Lout), lambda b: (b, 0, 0))

    return pl.pallas_call(
        _chomp1d_kernel,
        out_shape=jax.ShapeDtypeStruct((B, C, Lout), x.dtype),
        grid_spec=pltpu.PrefetchScalarGridSpec(
            num_scalar_prefetch=0,
            grid=grid,
            in_specs=[in_spec],
            out_specs=out_spec,
        ),
        compiler_params=pltpu.CompilerParams(
            dimension_semantics=("parallel",) * len(grid)),
    )(x)


# ---------------------------------------------------------------------------
# TemporalBlock: conv1(k=2, dil=d, causal via pad+chomp) -> CELU
#                conv2(same)                             -> CELU
#                residual 1x1 conv, out = CELU(branch + residual)
# ---------------------------------------------------------------------------
def _temporal_block_kernel(x_ref, w1t0_ref, wa_ref, w2t0_ref, w2t1_ref, b_ref,
                           o_ref, xcarry_ref, hcarry_ref, *, d, cout):
    l = pl.program_id(1)
    T = x_ref.shape[-1]
    hw = xcarry_ref.shape[-1]          # halo width, a multiple of 128, >= d
    cdt = x_ref.dtype
    f32 = jnp.float32

    # Reset the causal halo carries at the start of every sequence (zero
    # left-padding, exactly like pad=(k-1)*d + chomp in PyTorch).
    @pl.when(l == 0)
    def _():
        xcarry_ref[...] = jnp.zeros_like(xcarry_ref)
        hcarry_ref[...] = jnp.zeros_like(hcarry_ref)

    def causal_shift(v, carry_ref):
        # out[:, t] = v[:, t-d] for t >= d; the first d columns come from the
        # carry (last `hw` columns of the previous tile, zeros at t==0).
        # Lane-aligned concat (boundary at hw, a multiple of 128) + one static
        # slice: the only cross-lane work is the d-lane shift itself.
        c = v.shape[0]
        wide = jnp.concatenate([carry_ref[...], v], axis=1)        # (c, hw+T)
        return jax.lax.slice(wide, (0, hw - d), (c, hw - d + T))   # (c, T)

    x = x_ref[0]                                                    # (Cin, T)
    x_prev = causal_shift(x, xcarry_ref)

    # conv1 tap1 and the 1x1 residual fused into a single MXU pass over x.
    comb = jnp.dot(wa_ref[...], x, preferred_element_type=f32)      # (2Cout, T)
    h1 = _celu(jnp.dot(w1t0_ref[...], x_prev, preferred_element_type=f32)
               + comb[:cout] + b_ref[:, 0:1])
    res = comb[cout:] + b_ref[:, 2:3]

    h1c = h1.astype(cdt)
    h_prev = causal_shift(h1c, hcarry_ref)
    h2 = _celu(jnp.dot(w2t0_ref[...], h_prev, preferred_element_type=f32)
               + jnp.dot(w2t1_ref[...], h1c, preferred_element_type=f32)
               + b_ref[:, 1:2])

    o_ref[0] = _celu(h2 + res).astype(o_ref.dtype)

    # Narrow halo carry: only the last `hw` columns touch VMEM (aligned slice).
    xcarry_ref[...] = x[:, T - hw:]
    hcarry_ref[...] = h1c[:, T - hw:]


def _pick_l_tile(Lp, hw, cin, cout, itemsize, budget_bytes=24 << 20):
    """Largest lane-dense tile dividing Lp (a multiple of 128) that is >= the
    halo width and keeps double-buffered in/out blocks + carries within a
    conservative VMEM budget (fits v7x's 64 MiB as well as v5e/v6e)."""
    cands = [t for t in (4096, 2048, 1024, 512, 256, 128)
             if t <= Lp and Lp % t == 0 and t >= hw]
    if not cands:
        return Lp
    for t in cands:                                    # largest first
        est = (2 * (cin + cout) * t + (cin + cout) * hw) * itemsize
        if est <= budget_bytes:
            return t
    return cands[-1]


def temporal_block_pallas(x_ncl, W1, b1, W2, b2, Wd, bd, dilation,
                          *, compute_dtype=jnp.bfloat16):
    """x_ncl: (B, Cin, L) as in PyTorch NCL.  Returns (B, Cout, L) in
    `compute_dtype` (bf16 by default; pass jnp.float32 for exact f32).

    Note: PyTorch's TemporalBlock uses an identity residual when Cin == Cout;
    callers must pass an identity Wd (and bd=0) in that case.
    """
    B, Cin, L = x_ncl.shape
    Cout = W1.shape[0]
    d = int(dilation)
    assert W1.shape == (Cout, Cin, 2) and W2.shape == (Cout, Cout, 2)
    assert Wd.shape[:2] == (Cout, Cin)

    cdt = compute_dtype
    # Pad the time axis to a lane-dense multiple of 128; causality guarantees
    # the first L output columns are unaffected by the zero tail.
    Lp = _round_up(max(L, d), 128)
    x = x_ncl.astype(cdt)
    if Lp != L:
        x = jnp.pad(x, ((0, 0), (0, 0), (0, Lp - L)))

    hw = min(Lp, _round_up(d, 128))                    # halo width (>= d)
    T = _pick_l_tile(Lp, hw, Cin, Cout, jnp.dtype(cdt).itemsize)
    nt = Lp // T

    # Weight prep: tap0 acts on x[t-d]; tap1 acts on x[t]; the 1x1 residual is
    # stacked under tap1 so one matmul produces [h1_tap1 ; res].
    w1t0 = W1[:, :, 0].astype(cdt)                                   # (Cout, Cin)
    wa = jnp.concatenate([W1[:, :, 1], Wd[:, :, 0]], axis=0).astype(cdt)  # (2Cout, Cin)
    w2t0 = W2[:, :, 0].astype(cdt)                                   # (Cout, Cout)
    w2t1 = W2[:, :, 1].astype(cdt)                                   # (Cout, Cout)
    b_packed = jnp.stack([b1, b2, bd], axis=1).astype(jnp.float32)   # (Cout, 3)

    kernel = functools.partial(_temporal_block_kernel, d=d, cout=Cout)

    out = pl.pallas_call(
        kernel,
        out_shape=jax.ShapeDtypeStruct((B, Cout, Lp), cdt),
        grid_spec=pltpu.PrefetchScalarGridSpec(
            num_scalar_prefetch=0,
            grid=(B, nt),                      # L-tiles innermost (causal carry)
            in_specs=[
                pl.BlockSpec((1, Cin, T), lambda b, l: (b, 0, l)),     # x tile
                pl.BlockSpec((Cout, Cin), lambda b, l: (0, 0)),        # W1 tap0
                pl.BlockSpec((2 * Cout, Cin), lambda b, l: (0, 0)),    # [W1 tap1; Wd]
                pl.BlockSpec((Cout, Cout), lambda b, l: (0, 0)),       # W2 tap0
                pl.BlockSpec((Cout, Cout), lambda b, l: (0, 0)),       # W2 tap1
                pl.BlockSpec((Cout, 3), lambda b, l: (0, 0)),          # biases (f32)
            ],
            out_specs=pl.BlockSpec((1, Cout, T), lambda b, l: (b, 0, l)),
            scratch_shapes=[
                pltpu.VMEM((Cin, hw), cdt),    # x halo carry (narrow)
                pltpu.VMEM((Cout, hw), cdt),   # h1 halo carry (narrow)
            ],
        ),
        compiler_params=pltpu.CompilerParams(
            # batch shards across TensorCores (v7x megacore); the L-tile axis
            # is sequential because of the causal halo carry.
            dimension_semantics=("parallel", "arbitrary"),
            vmem_limit_bytes=48 * 1024 * 1024,
        ),
    )(x, w1t0, wa, w2t0, w2t1, b_packed)

    return out[:, :, :L] if Lp != L else out


# ---------------------------------------------------------------------------
# Pure-JAX reference (matches PyTorch conv + Chomp1d + CELU, x2, residual)
# ---------------------------------------------------------------------------
def temporal_block_reference(x_ncl, W1, b1, W2, b2, Wd, bd, dilation):
    k = W1.shape[2]
    pad = (k - 1) * dilation
    dn = ('NCH', 'OIH', 'NCH')

    def conv(x, W, b, dil, p):
        y = jax.lax.conv_general_dilated(
            x, W, window_strides=(1,), padding=[(p, p)],
            rhs_dilation=(dil,), dimension_numbers=dn,
            precision=jax.lax.Precision.HIGHEST)
        return y + b[None, :, None]

    celu = jax.nn.celu
    h = celu(conv(x_ncl, W1, b1, dilation, pad)[:, :, :-pad])   # conv1+chomp+CELU
    h = celu(conv(h, W2, b2, dilation, pad)[:, :, :-pad])       # conv2+chomp+CELU
    res = conv(x_ncl, Wd, bd, 1, 0)                             # 1x1 downsample
    return celu(h + res)


if __name__ == "__main__":
    B, Cin, Cout, L = 2, 4, 8, 16
    K, DIL = 2, 4
    PAD = (K - 1) * DIL

    key = jax.random.PRNGKey(0)
    kx, k1, kb1, k2, kb2, kd, kbd = jax.random.split(key, 7)

    x = jax.random.normal(kx, (B, Cin, L), dtype=jnp.float32)
    W1 = 0.3 * jax.random.normal(k1, (Cout, Cin, K), dtype=jnp.float32)
    b1 = 0.1 * jax.random.normal(kb1, (Cout,), dtype=jnp.float32)
    W2 = 0.3 * jax.random.normal(k2, (Cout, Cout, K), dtype=jnp.float32)
    b2 = 0.1 * jax.random.normal(kb2, (Cout,), dtype=jnp.float32)
    Wd = 0.3 * jax.random.normal(kd, (Cout, Cin, 1), dtype=jnp.float32)
    bd = 0.1 * jax.random.normal(kbd, (Cout,), dtype=jnp.float32)

    # --- literal Chomp1d: small-sequence fallback path -----------------------
    chomped = jax.block_until_ready(chomp1d_pallas(x, PAD))
    np.testing.assert_array_equal(np.asarray(chomped), np.asarray(x[:, :, :-PAD]))

    # --- literal Chomp1d: lane-dense L-tiled path -----------------------------
    xl = jax.random.normal(kx, (2, 8, 1152), dtype=jnp.float32)
    chomped_l = jax.block_until_ready(chomp1d_pallas(xl, 128))
    np.testing.assert_array_equal(np.asarray(chomped_l), np.asarray(xl[:, :, :-128]))

    # --- TemporalBlock, exact-f32 path ---------------------------------------
    out_f32 = jax.block_until_ready(
        temporal_block_pallas(x, W1, b1, W2, b2, Wd, bd, DIL,
                              compute_dtype=jnp.float32))
    ref_f32 = jax.block_until_ready(
        temporal_block_reference(x, W1, b1, W2, b2, Wd, bd, DIL))
    np.testing.assert_allclose(np.asarray(out_f32), np.asarray(ref_f32),
                               rtol=5e-3, atol=5e-3)

    # --- TemporalBlock, default bf16 activations (f32 accumulation) ----------
    rt = lambda a: a.astype(jnp.bfloat16).astype(jnp.float32)
    out_bf = jax.block_until_ready(
        temporal_block_pallas(x, W1, b1, W2, b2, Wd, bd, DIL))     # bf16 default
    ref_bf = jax.block_until_ready(
        temporal_block_reference(rt(x), rt(W1), b1, rt(W2), b2, rt(Wd), bd, DIL))
    np.testing.assert_allclose(np.asarray(out_bf.astype(jnp.float32)),
                               np.asarray(ref_bf), rtol=4e-2, atol=4e-2)

    print("KERNEL_OK")
</pallas_src>

<mosaic_0001>
module attributes {stable_mosaic.version = 11 : i64} {
  func.func @_chomp1d_kernel(%arg0: i32, %arg1: memref<1x4x16xf32, #tpu.memory_space<vmem>>, %arg2: memref<1x4x12xf32, #tpu.memory_space<vmem>>) attributes {dimension_semantics = [#tpu.dimension_semantics<parallel>], iteration_bounds = array<i64: 2>, scalar_prefetch = 0 : i64, scratch_operands = 0 : i64, tpu.core_type = #tpu.core_type<tc>, window_params = [{transform_indices = @transform_0, window_bounds = array<i64: 1, 4, 16>}, {transform_indices = @transform_1, window_bounds = array<i64: 1, 4, 12>}]} {
    %c0 = arith.constant 0 : index
    %c0_0 = arith.constant 0 : index
    %c0_1 = arith.constant 0 : index
    %0 = vector.load %arg1[%c0, %c0_0, %c0_1] : memref<1x4x16xf32, #tpu.memory_space<vmem>>, vector<1x4x12xf32>
    %c0_2 = arith.constant 0 : index
    %c0_3 = arith.constant 0 : index
    %c0_4 = arith.constant 0 : index
    %1 = vector.load %arg2[%c0_2, %c0_3, %c0_4] : memref<1x4x12xf32, #tpu.memory_space<vmem>>, vector<1x4x12xf32>
    tpu.vector_store %arg2[%c0_2, %c0_3, %c0_4], %0 {strides = array<i32>} : memref<1x4x12xf32, #tpu.memory_space<vmem>>, vector<1x4x12xf32>,
    return
  }
  func.func @transform_0(%arg0: i32) -> (i32, i32, i32) {
    %c0_i32 = arith.constant 0 : i32
    %c0_i32_0 = arith.constant 0 : i32
    %c0_i32_1 = arith.constant 0 : i32
    return %arg0, %c0_i32, %c0_i32_0 : i32, i32, i32
  }
  func.func @transform_1(%arg0: i32) -> (i32, i32, i32) {
    %c0_i32 = arith.constant 0 : i32
    %c0_i32_0 = arith.constant 0 : i32
    %c0_i32_1 = arith.constant 0 : i32
    return %arg0, %c0_i32, %c0_i32_0 : i32, i32, i32
  }
}

</mosaic_0001>

<llo_original>
// kernel: tpu_custom_call.1
$region0: #{tpu_custom_call.1}
  #allocation0 [shape = 'u32[]', space=smem, size = 0x4, offset = 0x4, fixed_abs, tag = 'smem constant byte address 0x4 - core index']
  #allocation1 [shape = 'u32[72,128]{1,0:T(1,128)}', space=vmem, size = 0x9000, scoped, tag = 'internal scratch']
  %s0 = inlined_call_operand.hbm [shape: f32[2,4,16], index: 0, kind: input, shape index: {}]
  %s1 = inlined_call_operand.hbm [shape: f32[2,4,12], index: 1, kind: output, shape index: {}]
  %s2 = sld [smem:[#allocation0]]
  $region41: #{tpu_custom_call.1} parent=0
    _
  %s4 = ssub.s32 1, %s2
  %s5 = scalar_select 0, %s4, %s2
  $region1: #{tpu_custom_call.1} parent=0
    #allocation2 [shape = 'u8[4096]{0}', space=vmem, size = 0x1000, scoped, tag = 'input window, operand 0']
    #allocation3 [shape = 's32[2]{0}', space=sflag, size = 0x8, scoped, tag = 'scoped memory for tpu_custom_call.1']
    #allocation4 [shape = 's32[2]{0}', space=sflag, size = 0x8, scoped, tag = 'scoped memory for tpu_custom_call.1']
    #allocation5 [shape = 'u8[4096]{0}', space=vmem, size = 0x1000, scoped, tag = 'output window, operand 0']
    %6 = vsyncpa [#allocation3], 0
    %s7 = scalar_lea.sflag [#allocation3], 1
    %8 = vsyncpa %s7, 0
    %9 = vsyncpa [#allocation4], 0
    %s10 = scalar_lea.sflag [#allocation4], 1
    %11 = vsyncpa %s10, 0
    loop: start=0, step=1, limit=4
    $region2: #{tpu_custom_call.1} parent=1 // loop_pre_header
      _
    $region3: #{tpu_custom_call.1} parent=1 // loop_header
      %s13 = sphi 0, %s17
      %p14 = scmp.ge.s32.totalorder %s13, 4
      %s23 = sphi 0, %s25
      %s26 = sphi 0, %s23
      %s27 = sphi 0, %s26
      %s43 = sphi 0, %s27
      %s49 = sphi 0, %s51
      %s52 = sphi 0, %s49
      %s53 = sphi 0, %s52
      %s69 = sphi 0, %s53
    $region4: #{tpu_custom_call.1} parent=1 // loop_header_branch
      %16 = sbr.rel (%p14) target = $region8
    $region5: #{tpu_custom_call.1} parent=1 // loop_body
      %s18 = ssub.s32 %s13, 1
      %s19 = ssub.s32 %s13, 2
      %s20 = sadd.s32 %s13, 1
      %s21 = ssub.s32 %s13, %s20
      %p22 = scmp.eq.s32.totalorder %s21, 0
      %s24 = sadd.s32 %s23, 1
      %s25 = scalar_select %p22, %s23, %s24
      %p28 = pneg %p22
      %p29 = scmp.eq.s32.totalorder %s13, 1
      %p30 = por %p28, %p29
      %p31 = scmp.ne.s32.totalorder %s23, %s26
      %p32 = scmp.eq.s32.totalorder %s13, 0
      %p33 = por %p31, %p32
      %p34 = scmp.ne.s32.totalorder %s23, %s26
      %p35 = scmp.eq.s32.totalorder %s18, 1
      %p36 = por %p34, %p35
      %p37 = scmp.ne.s32.totalorder %s26, %s27
      %p38 = scmp.eq.s32.totalorder %s18, 0
      %p39 = por %p37, %p38
      %p40 = scmp.ne.s32.totalorder %s26, %s27
      %p41 = scmp.eq.s32.totalorder %s19, 1
      %p42 = por %p40, %p41
      %p44 = scmp.ne.s32.totalorder %s27, %s43
      %p45 = scmp.eq.s32.totalorder %s19, 0
      %p46 = por %p44, %p45
      %s47 = ssub.s32 %s13, %s20
      %p48 = scmp.eq.s32.totalorder %s47, 0
      %s50 = sadd.s32 %s49, 1
      %s51 = scalar_select %p48, %s49, %s50
      %p54 = pneg %p48
      %p55 = scmp.eq.s32.totalorder %s13, 1
      %p56 = por %p54, %p55
      %p57 = scmp.ne.s32.totalorder %s49, %s52
      %p58 = scmp.eq.s32.totalorder %s13, 0
      %p59 = por %p57, %p58
      %p60 = scmp.ne.s32.totalorder %s49, %s52
      %p61 = scmp.eq.s32.totalorder %s18, 1
      %p62 = por %p60, %p61
      %p63 = scmp.ne.s32.totalorder %s52, %s53
      %p64 = scmp.eq.s32.totalorder %s18, 0
      %p65 = por %p63, %p64
      %p66 = scmp.ne.s32.totalorder %s52, %s53
      %p67 = scmp.eq.s32.totalorder %s19, 1
      %p68 = por %p66, %p67
      %p70 = scmp.ne.s32.totalorder %s53, %s69
      %p71 = scmp.eq.s32.totalorder %s19, 0
      %p72 = por %p70, %p71
      %p73 = scmp.le.s32.totalorder 1, %s13
      %p74 = scmp.lt.s32.totalorder %s13, 3
      %p75 = pnand %p73, %p74
      %p76 = pneg %p75
      // Predicated region
      $region9: #{tpu_custom_call.1} parent=5 // pred_check
        _
      $region10: #{tpu_custom_call.1} parent=5 // pred_check_branch
        %78 = sbr.rel (%p75) target = $region12
      $region11: #{tpu_custom_call.1} parent=5 // pred_region
        %s79 = ssub.s32 %s13, 1
      $region12: #{tpu_custom_call.1} parent=5 // pred_fallthru
        _
      %p80 = scmp.lt.s32.totalorder %s13, 2
      // Predicated region
      $region13: #{tpu_custom_call.1} parent=5 // pred_check
        %p81 = pneg %p80
      $region14: #{tpu_custom_call.1} parent=5 // pred_check_branch
        %83 = sbr.rel (%p81) target = $region16
      $region15: #{tpu_custom_call.1} parent=5 // pred_region
        // Predicated region
        $region17: #{tpu_custom_call.1} parent=15 // pred_check
          %p84 = pneg %p33
        $region18: #{tpu_custom_call.1} parent=15 // pred_check_branch
          %86 = sbr.rel (%p84) target = $region20
        $region19: #{tpu_custom_call.1} parent=15 // pred_region
          %s87 = sand.u32 %s23, 1
          %s88 = scalar_lea.sflag [#allocation3], %s87
          %s89 = sand.u32 %s23, 1
          %s90 = smul.addr %s89, 4
          %s91 = scalar_lea.vmem [#allocation2], %s90
          %93 = vsyncadd %s88, 0
          %s94 = smul.addr %s13, 4
          %s95 = scalar_lea.hbm %s0, %s94
          %s97 = sshll.u32 %s95, 4
          %s98 = int_to_ptr.hbm [resolvable:$true] %s97
          %s99 = sshll.u32 %s91, 4
          %s100 = int_to_ptr.vmem [resolvable:$true] %s99
          %102 = dma.hbm_to_vmem [thread:$0]  %s98, 64, %s100, %s88
        $region20: #{tpu_custom_call.1} parent=15 // pred_fallthru
          _
      $region16: #{tpu_custom_call.1} parent=5 // pred_fallthru
        _
      %p103 = scmp.le.s32.totalorder 1, %s13
      %p104 = scmp.lt.s32.totalorder %s13, 3
      %p105 = pnand %p103, %p104
      %p106 = pneg %p105
      // Predicated region
      $region21: #{tpu_custom_call.1} parent=5 // pred_check
        _
      $region22: #{tpu_custom_call.1} parent=5 // pred_check_branch
        %108 = sbr.rel (%p105) target = $region24
      $region23: #{tpu_custom_call.1} parent=5 // pred_region
        %s109 = ssub.s32 %s13, 1
        %s110 = sand.u32 %s26, 1
        %s111 = scalar_lea.sflag [#allocation3], %s110
        %s112 = sand.u32 %s26, 1
        %s113 = smul.addr %s112, 4
        %s114 = scalar_lea.vmem [#allocation2], %s113
        // Predicated region
        $region25: #{tpu_custom_call.1} parent=23 // pred_check
          %p115 = pneg %p39
        $region26: #{tpu_custom_call.1} parent=23 // pred_check_branch
          %117 = sbr.rel (%p115) target = $region28
        $region27: #{tpu_custom_call.1} parent=23 // pred_region
          %119 = dma.done %s111, 64
        $region28: #{tpu_custom_call.1} parent=23 // pred_fallthru
          _
        %s120 = sand.u32 %s26, 1
        %s121 = scalar_lea.sflag [#allocation3], %s120
        %s122 = sand.u32 %s26, 1
        %s123 = smul.addr %s122, 4
        %s124 = scalar_lea.vmem [#allocation2], %s123
        %p125 = pneg %p39
        %p126 = pneg %p36
        %p127 = pneg %p65
        %p128 = pneg %p62
        %s129 = sand.u32 %s52, 1
        %s130 = scalar_lea.sflag [#allocation4], %s129
        %s131 = sand.u32 %s52, 1
        %s132 = smul.addr %s131, 4
        %s133 = scalar_lea.vmem [#allocation5], %s132
        %v134 = vld [vmem:[%s114] sm:$0xf]
        %vm135 = vcmask 93184
        %136 = vst.msk [vmem:[%s133] sm:$0xf] %vm135, %v134
        %s137 = sand.u32 %s52, 1
        %s138 = scalar_lea.sflag [#allocation4], %s137
        %s139 = sand.u32 %s52, 1
        %s140 = smul.addr %s139, 4
        %s141 = scalar_lea.vmem [#allocation5], %s140
        // Predicated region
        $region29: #{tpu_custom_call.1} parent=23 // pred_check
          %p142 = pneg %p62
        $region30: #{tpu_custom_call.1} parent=23 // pred_check_branch
          %144 = sbr.rel (%p142) target = $region32
        $region31: #{tpu_custom_call.1} parent=23 // pred_region
          %146 = vsyncadd %s138, 0
          %s147 = smul.addr %s18, 4
          %s148 = scalar_lea.hbm %s1, %s147
          %s150 = sshll.u32 %s141, 4
          %s151 = int_to_ptr.vmem [resolvable:$true] %s150
          %s152 = sshll.u32 %s148, 4
          %s153 = int_to_ptr.hbm [resolvable:$true] %s152
          %155 = dma.vmem_to_hbm [thread:$0]  %s151, 64, %s153, %s138
        $region32: #{tpu_custom_call.1} parent=23 // pred_fallthru
          _
      $region24: #{tpu_custom_call.1} parent=5 // pred_fallthru
        _
      %p156 = scmp.le.s32.totalorder 2, %s13
      // Predicated region
      $region33: #{tpu_custom_call.1} parent=5 // pred_check
        %p157 = pneg %p156
      $region34: #{tpu_custom_call.1} parent=5 // pred_check_branch
        %159 = sbr.rel (%p157) target = $region36
      $region35: #{tpu_custom_call.1} parent=5 // pred_region
        %s160 = ssub.s32 %s13, 2
        // Predicated region
        $region37: #{tpu_custom_call.1} parent=35 // pred_check
          %p161 = pneg %p68
        $region38: #{tpu_custom_call.1} parent=35 // pred_check_branch
          %163 = sbr.rel (%p161) target = $region40
        $region39: #{tpu_custom_call.1} parent=35 // pred_region
          %s164 = sand.u32 %s53, 1
          %s165 = scalar_lea.sflag [#allocation4], %s164
          %s166 = sand.u32 %s53, 1
          %s167 = smul.addr %s166, 4
          %s168 = scalar_lea.vmem [#allocation5], %s167
          %170 = dma.done %s165, 64
        $region40: #{tpu_custom_call.1} parent=35 // pred_fallthru
          _
      $region36: #{tpu_custom_call.1} parent=5 // pred_fallthru
        _
    $region6: #{tpu_custom_call.1} parent=1 // loop_footer
      %s17 = sadd.s32 1, %s13
    $region7: #{tpu_custom_call.1} parent=1 // loop_footer_branch
      %12 = sbr.rel target = $region3
    $region8: #{tpu_custom_call.1} parent=1 // loop_exit
      _
    %171 = vsyncpa [#allocation3], 1
    %s172 = scalar_lea.sflag [#allocation3], 1
    %173 = vsyncpa %s172, 1
    %174 = vsyncpa [#allocation4], 1
    %s175 = scalar_lea.sflag [#allocation4], 1
    %176 = vsyncpa %s175, 1

</llo_original>
